<compile_context>
chip_gen: v7x
topology: tpu7x:2x2x1
jax: 0.10.0
libtpu: 0.0.40
codegen_flags: <defaults>
</compile_context>

<pallas_src>
import jax
import jax.numpy as jnp
from jax import lax
from jax.experimental import pallas as pl
from jax.experimental.pallas import tpu as pltpu

LN_EPS = 1e-5  # PyTorch nn.LayerNorm default


def _round_up(x: int, m: int) -> int:
    return ((x + m - 1) // m) * m


def _pick_tm(M: int, tm=None) -> int:
    if tm is None:
        # Aim for >= ~4 grid steps so v7x's two TensorCores each get >= 2 steps
        # and the auto-pipeline can overlap DMA with compute; cap at 1024 rows
        # (double-buffered footprint stays a few MiB).
        tm = -(-M // 4)                 # cdiv(M, 4)
        tm = min(max(tm, 128), 1024)
    tm = _round_up(max(int(tm), 8), 8)  # sublane multiple
    tm = min(tm, _round_up(M, 8))       # never larger than the row count
    return tm


def shared_mlp_kernel(x_ref, w_ref, p_ref, o_ref):
    # x_ref: (tm, K) in the activation's native dtype.
    # w_ref: (K, out_dim) in the MXU compute dtype (bf16), grid-invariant.
    # p_ref: (3, out_dim) f32 = [bias; ln_gamma; ln_beta], grid-invariant.
    x = x_ref[...]
    if x.dtype != w_ref.dtype:
        x = x.astype(w_ref.dtype)      # bf16 operands into the MXU, f32 accumulate
    y = jnp.dot(x, w_ref[...], preferred_element_type=jnp.float32)

    params = p_ref[...]                # (3, out_dim) f32
    y = y + params[0:1, :]             # linear bias

    # LayerNorm over the feature (lane) axis, f32, centered (two-pass) variance.
    inv_d = 1.0 / y.shape[-1]
    mean = jnp.sum(y, axis=-1, keepdims=True) * inv_d
    yc = y - mean
    var = jnp.sum(yc * yc, axis=-1, keepdims=True) * inv_d
    y_norm = yc * lax.rsqrt(var + LN_EPS)
    y_norm = y_norm * params[1:2, :] + params[2:3, :]

    # ReLU + store in the output dtype (lane-dense whenever out_dim % 128 == 0).
    o_ref[...] = jnp.maximum(y_norm, 0.0).astype(o_ref.dtype)


def shared_mlp(x, w_t, b, gamma, beta, *, tm=None,
               compute_dtype=jnp.bfloat16, out_dtype=None):
    """SharedMlp forward: ReLU(LayerNorm(x @ w_t + b)).

    x:     (..., in_dim)
    w_t:   (in_dim, out_dim)   -- nn.Linear.weight pre-transposed
    b, gamma, beta: (out_dim,)
    """
    in_dim = x.shape[-1]
    out_dim = w_t.shape[-1]
    lead = x.shape[:-1]
    if out_dtype is None:
        out_dtype = x.dtype
    if compute_dtype is None:
        compute_dtype = x.dtype

    x2 = x.reshape(-1, in_dim)
    M = x2.shape[0]

    # Pad tiny contraction dims (e.g. DP3's first layer: in_dim=3) to a sublane
    # multiple of 8. Padded weight rows are zero, so the result is exact.
    if in_dim % 8 != 0:
        k_pad = _round_up(in_dim, 8) - in_dim
        x2 = jnp.pad(x2, ((0, 0), (0, k_pad)))
        w_t = jnp.pad(w_t, ((0, k_pad), (0, 0)))
        in_dim = in_dim + k_pad

    tm = _pick_tm(M, tm)
    grid = (pl.cdiv(M, tm),)           # ragged last block: Pallas masks its stores

    # Weight in the MXU compute dtype (one-time, grid-invariant cast).
    w_mx = w_t.astype(compute_dtype)
    # Pack bias / LN gamma / LN beta into one f32 (3, out_dim) grid-invariant slab.
    params = jnp.stack(
        [jnp.asarray(b, jnp.float32).reshape(-1),
         jnp.asarray(gamma, jnp.float32).reshape(-1),
         jnp.asarray(beta, jnp.float32).reshape(-1)],
        axis=0,
    )

    # VMEM budget ~2x the actual footprint (no arbitrary floor/cap into the
    # 64 MiB v7x budget). Grid-invariant operands are still double-buffered by
    # the auto-pipeliner, so count them twice.
    x_bytes = jnp.dtype(x2.dtype).itemsize
    w_bytes = jnp.dtype(compute_dtype).itemsize
    o_bytes = jnp.dtype(out_dtype).itemsize
    vmem_need = (2 * tm * in_dim * x_bytes          # double-buffered x tiles
                 + 2 * tm * out_dim * o_bytes       # double-buffered output tiles
                 + 2 * in_dim * out_dim * w_bytes   # weight
                 + 2 * 8 * out_dim * 4              # packed params (sublane-padded)
                 + tm * out_dim * 4                 # f32 accumulator / LN temps
                 + tm * in_dim * w_bytes)           # in-kernel bf16 cast of x tile
    vmem_limit = int(min(max(2 * vmem_need, 8 * 1024 * 1024), 96 * 1024 * 1024))

    out = pl.pallas_call(
        shared_mlp_kernel,
        out_shape=jax.ShapeDtypeStruct((M, out_dim), out_dtype),
        grid_spec=pltpu.PrefetchScalarGridSpec(
            num_scalar_prefetch=0,
            grid=grid,
            in_specs=[
                pl.BlockSpec((tm, in_dim), lambda i: (i, 0)),        # x rows (pipelined)
                pl.BlockSpec((in_dim, out_dim), lambda i: (0, 0)),   # weight (grid-invariant)
                pl.BlockSpec((3, out_dim), lambda i: (0, 0)),        # bias/gamma/beta
            ],
            out_specs=pl.BlockSpec((tm, out_dim), lambda i: (i, 0)),
        ),
        compiler_params=pltpu.CompilerParams(
            dimension_semantics=("parallel",),
            vmem_limit_bytes=vmem_limit,
        ),
    )(x2, w_mx, params)

    return out.reshape(*lead, out_dim)


def shared_mlp_reference(x, w_t, b, gamma, beta):
    y = jnp.einsum("...i,io->...o", x, w_t) + b.reshape(-1)
    mean = jnp.mean(y, axis=-1, keepdims=True)
    var = jnp.mean((y - mean) ** 2, axis=-1, keepdims=True)
    yn = (y - mean) / jnp.sqrt(var + LN_EPS)
    yn = yn * gamma.reshape(-1) + beta.reshape(-1)
    return jnp.maximum(yn, 0.0)


def _bf16_round(a):
    # Mirror the kernel's bf16 MXU-operand rounding for the reference check.
    return a.astype(jnp.bfloat16).astype(jnp.float32)


if __name__ == "__main__":
    key = jax.random.PRNGKey(0)
    k_x, k_w, k_b, k_x2, k_w2, k_b2 = jax.random.split(key, 6)

    # DP3 SharedMlp mid layer (128 -> 256). M = 2*500 = 1000 rows exercises the
    # ragged-last-block path: tm=256 -> grid=(4,), last block masked.
    B, N, in_dim, out_dim = 2, 500, 128, 256
    x = jax.random.normal(k_x, (B, N, in_dim), dtype=jnp.float32)
    w = jax.random.normal(k_w, (out_dim, in_dim), dtype=jnp.float32) / jnp.sqrt(in_dim)
    w_t = jnp.transpose(w)             # nn.Linear.weight is (out, in); pre-transpose
    b = jax.random.normal(k_b, (out_dim,), dtype=jnp.float32) * 0.02
    gamma = jnp.ones((out_dim,), dtype=jnp.float32)   # nn.LayerNorm init
    beta = jnp.zeros((out_dim,), dtype=jnp.float32)

    out = jax.block_until_ready(shared_mlp(x, w_t, b, gamma, beta))
    assert out.shape == (B, N, out_dim)
    # Compare against a reference on bf16-rounded operands (kernel feeds the MXU
    # bf16 with an f32 accumulator), so the check isolates kernel correctness.
    ref = shared_mlp_reference(_bf16_round(x), _bf16_round(w_t), b, gamma, beta)
    err = float(jnp.max(jnp.abs(out - ref)))
    assert jnp.allclose(out, ref, atol=3e-3, rtol=3e-3), err

    # DP3 first layer (3 -> 64): exercises the K-padding path (K=3 -> 8).
    in2, out2 = 3, 64
    x_s = jax.random.normal(k_x2, (B, 128, in2), dtype=jnp.float32)
    w2 = jax.random.normal(k_w2, (out2, in2), dtype=jnp.float32) / jnp.sqrt(in2)
    b2 = jax.random.normal(k_b2, (out2,), dtype=jnp.float32) * 0.02
    g2 = jnp.ones((out2,), dtype=jnp.float32)
    beta2 = jnp.zeros((out2,), dtype=jnp.float32)

    out_s = jax.block_until_ready(shared_mlp(x_s, jnp.transpose(w2), b2, g2, beta2))
    assert out_s.shape == (B, 128, out2)
    ref_s = shared_mlp_reference(_bf16_round(x_s), _bf16_round(jnp.transpose(w2)), b2, g2, beta2)
    err_s = float(jnp.max(jnp.abs(out_s - ref_s)))
    assert jnp.allclose(out_s, ref_s, atol=3e-3, rtol=3e-3), err_s

    print("KERNEL_OK")
</pallas_src>

<mosaic_0001>
module attributes {stable_mosaic.version = 11 : i64} {
  func.func @shared_mlp_kernel(%arg0: i32, %arg1: memref<256x128xf32, #tpu.memory_space<vmem>>, %arg2: memref<128x256xbf16, #tpu.memory_space<vmem>>, %arg3: memref<3x256xf32, #tpu.memory_space<vmem>>, %arg4: memref<256x256xf32, #tpu.memory_space<vmem>>) attributes {dimension_semantics = [#tpu.dimension_semantics<parallel>], iteration_bounds = array<i64: 4>, scalar_prefetch = 0 : i64, scratch_operands = 0 : i64, tpu.core_type = #tpu.core_type<tc>, window_params = [{transform_indices = @transform_0, window_bounds = array<i64: 256, 128>}, {pipeline_mode = #tpu.pipeline_mode<synchronous>, transform_indices = @transform_1, window_bounds = array<i64: 128, 256>}, {pipeline_mode = #tpu.pipeline_mode<synchronous>, transform_indices = @transform_2, window_bounds = array<i64: 3, 256>}, {transform_indices = @transform_3, window_bounds = array<i64: 256, 256>}]} {
    %c0 = arith.constant 0 : index
    %c0_0 = arith.constant 0 : index
    %0 = vector.load %arg1[%c0, %c0_0] : memref<256x128xf32, #tpu.memory_space<vmem>>, vector<256x128xf32>
    %1 = arith.truncf %0 : vector<256x128xf32> to vector<256x128xbf16>
    %c0_1 = arith.constant 0 : index
    %c0_2 = arith.constant 0 : index
    %2 = vector.load %arg2[%c0_1, %c0_2] : memref<128x256xbf16, #tpu.memory_space<vmem>>, vector<128x256xbf16>
    %cst = arith.constant dense<0.000000e+00> : vector<256x256xf32>
    %3 = tpu.matmul %1, %2, %cst {dimension_numbers = #tpu.dot_dimension_numbers<[1], [0], [0], [1], [0, 0, 1, 1], [], []>} : vector<256x128xbf16>, vector<128x256xbf16>, vector<256x256xf32> -> vector<256x256xf32>
    %c0_3 = arith.constant 0 : index
    %c0_4 = arith.constant 0 : index
    %4 = vector.load %arg3[%c0_3, %c0_4] : memref<3x256xf32, #tpu.memory_space<vmem>>, vector<3x256xf32>
    %5 = vector.extract_strided_slice %4 {offsets = [0, 0], sizes = [1, 256], strides = [1, 1]} : vector<3x256xf32> to vector<1x256xf32>
    %6 = vector.broadcast %5 : vector<1x256xf32> to vector<256x256xf32>
    %7 = arith.addf %3, %6 : vector<256x256xf32>
    %cst_5 = arith.constant dense<0.000000e+00> : vector<256xf32>
    %8 = vector.multi_reduction <add>, %7, %cst_5 [1] : vector<256x256xf32> to vector<256xf32>
    %9 = vector.shape_cast %8 : vector<256xf32> to vector<256x1xf32>
    %cst_6 = arith.constant 3.906250e-03 : f32
    %10 = vector.broadcast %cst_6 : f32 to vector<256x1xf32>
    %11 = arith.mulf %9, %10 : vector<256x1xf32>
    %12 = vector.broadcast %11 : vector<256x1xf32> to vector<256x256xf32>
    %13 = arith.subf %7, %12 : vector<256x256xf32>
    %14 = arith.mulf %13, %13 : vector<256x256xf32>
    %cst_7 = arith.constant dense<0.000000e+00> : vector<256xf32>
    %15 = vector.multi_reduction <add>, %14, %cst_7 [1] : vector<256x256xf32> to vector<256xf32>
    %16 = vector.shape_cast %15 : vector<256xf32> to vector<256x1xf32>
    %cst_8 = arith.constant 3.906250e-03 : f32
    %17 = vector.broadcast %cst_8 : f32 to vector<256x1xf32>
    %18 = arith.mulf %16, %17 : vector<256x1xf32>
    %cst_9 = arith.constant 9.99999974E-6 : f32
    %19 = vector.broadcast %cst_9 : f32 to vector<256x1xf32>
    %20 = arith.addf %18, %19 : vector<256x1xf32>
    %21 = math.rsqrt %20 : vector<256x1xf32>
    %22 = vector.broadcast %21 : vector<256x1xf32> to vector<256x256xf32>
    %23 = arith.mulf %13, %22 : vector<256x256xf32>
    %24 = vector.extract_strided_slice %4 {offsets = [1, 0], sizes = [1, 256], strides = [1, 1]} : vector<3x256xf32> to vector<1x256xf32>
    %25 = vector.broadcast %24 : vector<1x256xf32> to vector<256x256xf32>
    %26 = arith.mulf %23, %25 : vector<256x256xf32>
    %27 = vector.extract_strided_slice %4 {offsets = [2, 0], sizes = [1, 256], strides = [1, 1]} : vector<3x256xf32> to vector<1x256xf32>
    %28 = vector.broadcast %27 : vector<1x256xf32> to vector<256x256xf32>
    %29 = arith.addf %26, %28 : vector<256x256xf32>
    %cst_10 = arith.constant 0.000000e+00 : f32
    %30 = vector.broadcast %cst_10 : f32 to vector<256x256xf32>
    %31 = arith.maximumf %29, %30 : vector<256x256xf32>
    %c0_11 = arith.constant 0 : index
    %c0_12 = arith.constant 0 : index
    %32 = vector.load %arg4[%c0_11, %c0_12] : memref<256x256xf32, #tpu.memory_space<vmem>>, vector<256x256xf32>
    tpu.vector_store %arg4[%c0_11, %c0_12], %31 {strides = array<i32>} : memref<256x256xf32, #tpu.memory_space<vmem>>, vector<256x256xf32>,
    return
  }
  func.func @transform_0(%arg0: i32) -> (i32, i32) {
    %c0_i32 = arith.constant 0 : i32
    %c0_i32_0 = arith.constant 0 : i32
    return %arg0, %c0_i32 : i32, i32
  }
  func.func @transform_1(%arg0: i32) -> (i32, i32) {
    %c0_i32 = arith.constant 0 : i32
    %c0_i32_0 = arith.constant 0 : i32
    %c0_i32_1 = arith.constant 0 : i32
    return %c0_i32, %c0_i32_0 : i32, i32
  }
  func.func @transform_2(%arg0: i32) -> (i32, i32) {
    %c0_i32 = arith.constant 0 : i32
    %c0_i32_0 = arith.constant 0 : i32
    %c0_i32_1 = arith.constant 0 : i32
    return %c0_i32, %c0_i32_0 : i32, i32
  }
  func.func @transform_3(%arg0: i32) -> (i32, i32) {
    %c0_i32 = arith.constant 0 : i32
    %c0_i32_0 = arith.constant 0 : i32
    return %arg0, %c0_i32 : i32, i32
  }
}

</mosaic_0001>

<llo_original>
// kernel: tpu_custom_call.1
$region0: #{tpu_custom_call.1}
  #allocation0 [shape = 'u32[]', space=smem, size = 0x4, offset = 0x4, fixed_abs, tag = 'smem constant byte address 0x4 - core index']
  #allocation1 [shape = 'u32[144,128]{1,0:T(1,128)}', space=vmem, size = 0x12000, scoped, tag = 'internal scratch']
  %s0 = inlined_call_operand.hbm [shape: f32[1000,128], index: 0, kind: input, shape index: {}]
  %s1 = inlined_call_operand.hbm [shape: bf16[128,256], index: 1, kind: input, shape index: {}]
  %s2 = inlined_call_operand.hbm [shape: f32[3,256], index: 2, kind: input, shape index: {}]
  %s3 = inlined_call_operand.hbm [shape: f32[1000,256], index: 3, kind: output, shape index: {}]
  %s4 = sld [smem:[#allocation0]]
  $region57: #{tpu_custom_call.1} parent=0
    _
  %s6 = ssub.s32 1, %s4
  %s7 = scalar_select 0, %s6, %s4
  $region1: #{tpu_custom_call.1} parent=0
    #allocation2 [shape = 'u8[262144]{0}', space=vmem, size = 0x40000, scoped, tag = 'input window, operand 0']
    #allocation3 [shape = 's32[2]{0}', space=sflag, size = 0x8, scoped, tag = 'scoped memory for tpu_custom_call.1']
    #allocation4 [shape = 's32[2]{0}', space=sflag, size = 0x8, scoped, tag = 'scoped memory for tpu_custom_call.1']
    #allocation5 [shape = 'u8[65536]{0}', space=vmem, size = 0x10000, scoped, tag = 'input window, operand 1, single buffered']
    #allocation6 [shape = 's32[1]{0}', space=sflag, size = 0x4, scoped, tag = 'scoped memory for tpu_custom_call.1']
    #allocation7 [shape = 'u8[4096]{0}', space=vmem, size = 0x1000, scoped, tag = 'input window, operand 2, single buffered']
    #allocation8 [shape = 'u8[524288]{0}', space=vmem, size = 0x80000, scoped, tag = 'output window, operand 0']
    %8 = vsyncpa [#allocation3], 0
    %s9 = scalar_lea.sflag [#allocation3], 1
    %10 = vsyncpa %s9, 0
    %11 = vsyncpa [#allocation6], 0
    %12 = vsyncpa [#allocation4], 0
    %s13 = scalar_lea.sflag [#allocation4], 1
    %14 = vsyncpa %s13, 0
    loop: start=0, step=1, limit=6
    $region2: #{tpu_custom_call.1} parent=1 // loop_pre_header
      _
    $region3: #{tpu_custom_call.1} parent=1 // loop_header
      %s16 = sphi 0, %s20
      %p17 = scmp.ge.s32.totalorder %s16, 6
      %s26 = sphi 0, %s28
      %s29 = sphi 0, %s26
      %s30 = sphi 0, %s29
      %s46 = sphi 0, %s30
      %s50 = sphi 0, %s50
      %s52 = sphi 0, %s50
      %s53 = sphi 0, %s52
      %s67 = sphi 0, %s53
      %s71 = sphi 0, %s71
      %s73 = sphi 0, %s71
      %s74 = sphi 0, %s73
      %s88 = sphi 0, %s74
      %s94 = sphi 0, %s96
      %s97 = sphi 0, %s94
      %s98 = sphi 0, %s97
      %s114 = sphi 0, %s98
    $region4: #{tpu_custom_call.1} parent=1 // loop_header_branch
      %19 = sbr.rel (%p17) target = $region8
    $region5: #{tpu_custom_call.1} parent=1 // loop_body
      %s21 = ssub.s32 %s16, 1
      %s22 = ssub.s32 %s16, 2
      %s23 = sadd.s32 %s16, 1
      %s24 = ssub.s32 %s16, %s23
      %p25 = scmp.eq.s32.totalorder %s24, 0
      %s27 = sadd.s32 %s26, 1
      %s28 = scalar_select %p25, %s26, %s27
      %p31 = pneg %p25
      %p32 = scmp.eq.s32.totalorder %s16, 3
      %p33 = por %p31, %p32
      %p34 = scmp.ne.s32.totalorder %s26, %s29
      %p35 = scmp.eq.s32.totalorder %s16, 0
      %p36 = por %p34, %p35
      %p37 = scmp.ne.s32.totalorder %s26, %s29
      %p38 = scmp.eq.s32.totalorder %s21, 3
      %p39 = por %p37, %p38
      %p40 = scmp.ne.s32.totalorder %s29, %s30
      %p41 = scmp.eq.s32.totalorder %s21, 0
      %p42 = por %p40, %p41
      %p43 = scmp.ne.s32.totalorder %s29, %s30
      %p44 = scmp.eq.s32.totalorder %s22, 3
      %p45 = por %p43, %p44
      %p47 = scmp.ne.s32.totalorder %s30, %s46
      %p48 = scmp.eq.s32.totalorder %s22, 0
      %p49 = por %p47, %p48
      %s51 = sadd.s32 %s50, 1
      %p54 = scmp.eq.s32.totalorder %s16, 3
      %p55 = scmp.ne.s32.totalorder %s50, %s52
      %p56 = scmp.eq.s32.totalorder %s16, 0
      %p57 = por %p55, %p56
      %p58 = scmp.ne.s32.totalorder %s50, %s52
      %p59 = scmp.eq.s32.totalorder %s21, 3
      %p60 = por %p58, %p59
      %p61 = scmp.ne.s32.totalorder %s52, %s53
      %p62 = scmp.eq.s32.totalorder %s21, 0
      %p63 = por %p61, %p62
      %p64 = scmp.ne.s32.totalorder %s52, %s53
      %p65 = scmp.eq.s32.totalorder %s22, 3
      %p66 = por %p64, %p65
      %p68 = scmp.ne.s32.totalorder %s53, %s67
      %p69 = scmp.eq.s32.totalorder %s22, 0
      %p70 = por %p68, %p69
      %s72 = sadd.s32 %s71, 1
      %p75 = scmp.eq.s32.totalorder %s16, 3
      %p76 = scmp.ne.s32.totalorder %s71, %s73
      %p77 = scmp.eq.s32.totalorder %s16, 0
      %p78 = por %p76, %p77
      %p79 = scmp.ne.s32.totalorder %s71, %s73
      %p80 = scmp.eq.s32.totalorder %s21, 3
      %p81 = por %p79, %p80
      %p82 = scmp.ne.s32.totalorder %s73, %s74
      %p83 = scmp.eq.s32.totalorder %s21, 0
      %p84 = por %p82, %p83
      %p85 = scmp.ne.s32.totalorder %s73, %s74
      %p86 = scmp.eq.s32.totalorder %s22, 3
      %p87 = por %p85, %p86
      %p89 = scmp.ne.s32.totalorder %s74, %s88
      %p90 = scmp.eq.s32.totalorder %s22, 0
      %p91 = por %p89, %p90
      %s92 = ssub.s32 %s16, %s23
      %p93 = scmp.eq.s32.totalorder %s92, 0
      %s95 = sadd.s32 %s94, 1
      %s96 = scalar_select %p93, %s94, %s95
      %p99 = pneg %p93
      %p100 = scmp.eq.s32.totalorder %s16, 3
      %p101 = por %p99, %p100
      %p102 = scmp.ne.s32.totalorder %s94, %s97
      %p103 = scmp.eq.s32.totalorder %s16, 0
      %p104 = por %p102, %p103
      %p105 = scmp.ne.s32.totalorder %s94, %s97
      %p106 = scmp.eq.s32.totalorder %s21, 3
      %p107 = por %p105, %p106
      %p108 = scmp.ne.s32.totalorder %s97, %s98
      %p109 = scmp.eq.s32.totalorder %s21, 0
      %p110 = por %p108, %p109
      %p111 = scmp.ne.s32.totalorder %s97, %s98
      %p112 = scmp.eq.s32.totalorder %s22, 3
      %p113 = por %p111, %p112
      %p115 = scmp.ne.s32.totalorder %s98, %s114
      %p116 = scmp.eq.s32.totalorder %s22, 0
      %p117 = por %p115, %p116
      %p118 = scmp.le.s32.totalorder 1, %s16
      %p119 = scmp.lt.s32.totalorder %s16, 5
      %p120 = pnand %p118, %p119
      %p121 = pneg %p120
      // Predicated region
      $region9: #{tpu_custom_call.1} parent=5 // pred_check
        _
      $region10: #{tpu_custom_call.1} parent=5 // pred_check_branch
        %123 = sbr.rel (%p120) target = $region12
      $region11: #{tpu_custom_call.1} parent=5 // pred_region
        %s124 = ssub.s32 %s16, 1
        // Predicated region
        $region13: #{tpu_custom_call.1} parent=11 // pred_check
          %p125 = pneg %p63
        $region14: #{tpu_custom_call.1} parent=11 // pred_check_branch
          %127 = sbr.rel (%p125) target = $region16
        $region15: #{tpu_custom_call.1} parent=11 // pred_region
          %s129 = ssub.s32 2048, 2048
          %130 = vsyncadd [#allocation6], %s129
          %s131 = sshll.u32 [#allocation5], 4
          %s132 = int_to_ptr.vmem [resolvable:$true] %s131
          %137 = dma.hbm_to_vmem [thread:$0]  %s1, 2048, %s132, [#allocation6], 128, 128, 8
        $region16: #{tpu_custom_call.1} parent=11 // pred_fallthru
          _
        // Predicated region
        $region17: #{tpu_custom_call.1} parent=11 // pred_check
          %p138 = pneg %p84
        $region18: #{tpu_custom_call.1} parent=11 // pred_check_branch
          %140 = sbr.rel (%p138) target = $region20
        $region19: #{tpu_custom_call.1} parent=11 // pred_region
          %s142 = ssub.s32 128, 128
          %143 = vsyncadd [#allocation6], %s142
          %s145 = sshll.u32 [#allocation7], 4
          %s146 = int_to_ptr.vmem [resolvable:$true] %s145
          %148 = dma.hbm_to_vmem [thread:$0]  %s2, 128, %s146, [#allocation6]
        $region20: #{tpu_custom_call.1} parent=11 // pred_fallthru
          _
      $region12: #{tpu_custom_call.1} parent=5 // pred_fallthru
        _
      %p149 = scmp.lt.s32.totalorder %s16, 4
      // Predicated region
      $region21: #{tpu_custom_call.1} parent=5 // pred_check
        %p150 = pneg %p149
      $region22: #{tpu_custom_call.1} parent=5 // pred_check_branch
        %152 = sbr.rel (%p150) target = $region24
      $region23: #{tpu_custom_call.1} parent=5 // pred_region
        // Predicated region
        $region25: #{tpu_custom_call.1} parent=23 // pred_check
          %p153 = pneg %p36
        $region26: #{tpu_custom_call.1} parent=23 // pred_check_branch
          %155 = sbr.rel (%p153) target = $region28
        $region27: #{tpu_custom_call.1} parent=23 // pred_region
          %s156 = sand.u32 %s26, 1
          %s157 = scalar_lea.sflag [#allocation3], %s156
          %s158 = sand.u32 %s26, 1
          %s159 = smul.addr %s158, 256
          %s160 = scalar_lea.vmem [#allocation2], %s159
          %s161 = smul.u32 32, %s16
          %s162 = ssub.s32 125, %s161
          %p163 = scmp.lt.s32.totalorder %s162, 32
          %s164 = scalar_select %p163, %s162, 32
          %s165 = smul.u32 128, %s164
          %s167 = ssub.s32 4096, %s165
          %168 = vsyncadd %s157, %s167
          %p169 = scmp.ne.s32.totalorder 0, %s165
          %s170 = smul.addr %s161, 128
          %s171 = scalar_lea.hbm %s0, %s170
          %s172 = smul.u32 8, %s164
          %s173 = sshll.u32 %s160, 4
          %s174 = int_to_ptr.vmem [resolvable:$true] %s173
          %s175 = sshll.u32 %s172, 4
          %179 = dma.hbm_to_vmem [thread:$0]  (%p169), %s171, %s175, %s174, %s157, 128, 128, 8
        $region28: #{tpu_custom_call.1} parent=23 // pred_fallthru
          _
      $region24: #{tpu_custom_call.1} parent=5 // pred_fallthru
        _
      %p180 = scmp.le.s32.totalorder 1, %s16
      %p181 = scmp.lt.s32.totalorder %s16, 5
      %p182 = pnand %p180, %p181
      %p183 = pneg %p182
      // Predicated region
      $region29: #{tpu_custom_call.1} parent=5 // pred_check
        _
      $region30: #{tpu_custom_call.1} parent=5 // pred_check_branch
        %185 = sbr.rel (%p182) target = $region32
      $region31: #{tpu_custom_call.1} parent=5 // pred_region
        %s186 = ssub.s32 %s16, 1
        %s187 = sand.u32 %s29, 1
        %s188 = scalar_lea.sflag [#allocation3], %s187
        %s189 = sand.u32 %s29, 1
        %s190 = smul.addr %s189, 256
        %s191 = scalar_lea.vmem [#allocation2], %s190
        // Predicated region
        $region33: #{tpu_custom_call.1} parent=31 // pred_check
          %p192 = pneg %p42
        $region34: #{tpu_custom_call.1} parent=31 // pred_check_branch
          %194 = sbr.rel (%p192) target = $region36
        $region35: #{tpu_custom_call.1} parent=31 // pred_region
          %195 = dma.done %s188, 4096
        $region36: #{tpu_custom_call.1} parent=31 // pred_fallthru
          _
        // Predicated region
        $region37: #{tpu_custom_call.1} parent=31 // pred_check
          %p196 = pneg %p63
        $region38: #{tpu_custom_call.1} parent=31 // pred_check_branch
          %198 = sbr.rel (%p196) target = $region40
        $region39: #{tpu_custom_call.1} parent=31 // pred_region
          %199 = dma.done [#allocation6], 2048
        $region40: #{tpu_custom_call.1} parent=31 // pred_fallthru
          _
        // Predicated region
        $region41: #{tpu_custom_call.1} parent=31 // pred_check
          %p200 = pneg %p84
        $region42: #{tpu_custom_call.1} parent=31 // pred_check_branch
          %202 = sbr.rel (%p200) target = $region44
        $region43: #{tpu_custom_call.1} parent=31 // pred_region
          %203 = dma.done [#allocation6], 128
        $region44: #{tpu_custom_call.1} parent=31 // pred_fallthru
          _
        %s204 = sand.u32 %s29, 1
        %s205 = scalar_lea.sflag [#allocation3], %s204
        %s206 = sand.u32 %s29, 1
        %s207 = smul.addr %s206, 256
        %s208 = scalar_lea.vmem [#allocation2], %s207
        %p209 = pneg %p42
        %p210 = pneg %p39
        %p211 = pneg %p63
        %p212 = pneg %p60
        %p213 = pneg %p84
        %p214 = pneg %p81
        %p215 = pneg %p110
        %p216 = pneg %p107
        %s217 = sand.u32 %s97, 1
        %s218 = scalar_lea.sflag [#allocation4], %s217
        %s219 = sand.u32 %s97, 1
        %s220 = smul.addr %s219, 512
        %s221 = scalar_lea.vmem [#allocation8], %s220
        %s222 = smul.u32 32, %s21
        %s223 = ssub.s32 125, %s222
        %p224 = scmp.lt.s32.totalorder %s223, 32
        %s225 = scalar_select %p224, %s223, 32
        %s226 = smul.u32 128, %s225
        %s227 = smul.u32 32, %s21
        %s228 = ssub.s32 125, %s227
        %p229 = scmp.lt.s32.totalorder %s228, 32
        %s230 = scalar_select %p229, %s228, 32
        %s231 = smul.u32 128, %s230
        %s232 = smul.u32 %s231, 2
        %v234 = vld [vmem:[%s191] sm:$0xff]
        %v235 = vld [vmem:[%s191 + $0x8] sm:$0xff]
        %v236 = vld [vmem:[%s191 + $0x10] sm:$0xff]
        %v237 = vld [vmem:[%s191 + $0x18] sm:$0xff]
        %v238 = vld [vmem:[%s191 + $0x20] sm:$0xff]
        %v239 = vld [vmem:[%s191 + $0x28] sm:$0xff]
        %v240 = vld [vmem:[%s191 + $0x30] sm:$0xff]
        %v241 = vld [vmem:[%s191 + $0x38] sm:$0xff]
        %v242 = vld [vmem:[%s191 + $0x40] sm:$0xff]
        %v243 = vld [vmem:[%s191 + $0x48] sm:$0xff]
        %v244 = vld [vmem:[%s191 + $0x50] sm:$0xff]
        %v245 = vld [vmem:[%s191 + $0x58] sm:$0xff]
        %v246 = vld [vmem:[%s191 + $0x60] sm:$0xff]
        %v247 = vld [vmem:[%s191 + $0x68] sm:$0xff]
        %v248 = vld [vmem:[%s191 + $0x70] sm:$0xff]
        %v249 = vld [vmem:[%s191 + $0x78] sm:$0xff]
        %v250 = vld [vmem:[%s191 + $0x80] sm:$0xff]
        %v251 = vld [vmem:[%s191 + $0x88] sm:$0xff]
        %v252 = vld [vmem:[%s191 + $0x90] sm:$0xff]
        %v253 = vld [vmem:[%s191 + $0x98] sm:$0xff]
        %v254 = vld [vmem:[%s191 + $0xa0] sm:$0xff]
        %v255 = vld [vmem:[%s191 + $0xa8] sm:$0xff]
        %v256 = vld [vmem:[%s191 + $0xb0] sm:$0xff]
        %v257 = vld [vmem:[%s191 + $0xb8] sm:$0xff]
        %v258 = vld [vmem:[%s191 + $0xc0] sm:$0xff]
        %v259 = vld [vmem:[%s191 + $0xc8] sm:$0xff]
        %v260 = vld [vmem:[%s191 + $0xd0] sm:$0xff]
        %v261 = vld [vmem:[%s191 + $0xd8] sm:$0xff]
        %v262 = vld [vmem:[%s191 + $0xe0] sm:$0xff]
        %v263 = vld [vmem:[%s191 + $0xe8] sm:$0xff]
        %v264 = vld [vmem:[%s191 + $0xf0] sm:$0xff]
        %v265 = vld [vmem:[%s191 + $0xf8] sm:$0xff]
        %v266 = vpack.c.bf16 %v235, %v234
        %v267 = vpack.c.bf16 %v237, %v236
        %v268 = vpack.c.bf16 %v239, %v238
        %v269 = vpack.c.bf16 %v241, %v240
        %v270 = vpack.c.bf16 %v243, %v242
        %v271 = vpack.c.bf16 %v245, %v244
        %v272 = vpack.c.bf16 %v247, %v246
        %v273 = vpack.c.bf16 %v249, %v248
        %v274 = vpack.c.bf16 %v251, %v250
        %v275 = vpack.c.bf16 %v253, %v252
        %v276 = vpack.c.bf16 %v255, %v254
        %v277 = vpack.c.bf16 %v257, %v256
        %v278 = vpack.c.bf16 %v259, %v258
        %v279 = vpack.c.bf16 %v261, %v260
        %v280 = vpack.c.bf16 %v263, %v262
        %v281 = vpack.c.bf16 %v265, %v264
        %v282 = vld [vmem:[#allocation5] sm:$0xff]
        %v283 = vld [vmem:[#allocation5 + $0x8] sm:$0xff]
        %v284 = vld [vmem:[#allocation5 + $0x10] sm:$0xff]
        %v285 = vld [vmem:[#allocation5 + $0x18] sm:$0xff]
        %v286 = vld [vmem:[#allocation5 + $0x20] sm:$0xff]
        %v287 = vld [vmem:[#allocation5 + $0x28] sm:$0xff]
        %v288 = vld [vmem:[#allocation5 + $0x30] sm:$0xff]
        %v289 = vld [vmem:[#allocation5 + $0x38] sm:$0xff]
        %v290 = vld [vmem:[#allocation5 + $0x40] sm:$0xff]
        %v291 = vld [vmem:[#allocation5 + $0x48] sm:$0xff]
        %v292 = vld [vmem:[#allocation5 + $0x50] sm:$0xff]
        %v293 = vld [vmem:[#allocation5 + $0x58] sm:$0xff]
        %v294 = vld [vmem:[#allocation5 + $0x60] sm:$0xff]
        %v295 = vld [vmem:[#allocation5 + $0x68] sm:$0xff]
        %v296 = vld [vmem:[#allocation5 + $0x70] sm:$0xff]
        %v297 = vld [vmem:[#allocation5 + $0x78] sm:$0xff]
        %v298 = vld [vmem:[#allocation7] sm:$0x77]
        %v300 = vlaneseq
        %v301 = vshrl.u32 %v300, 7
        %v302 = vsub.s32 0, %v301
        %v303 = vrot.slane %v298, %v302
        %v304 = vlaneseq
        %v305 = vshrl.u32 %v304, 7
        %v306 = vsub.s32 4, %v305
        %v307 = vrot.slane %v298, %v306
        %v310 = vlaneseq
        %v311 = vshrl.u32 %v310, 7
        %v312 = vsub.s32 0, %v311
        %v313 = vrot.slane %v303, %v312
        %v314 = vlaneseq
        %v315 = vshrl.u32 %v314, 7
        %v316 = vsub.s32 0, %v315
        %v317 = vrot.slane %v307, %v316
        %v334 = vunpack.c.l.b16 %v282
        %v335 = vunpack.c.h.b16 %v282
        %v336 = vunpack.c.l.b16 %v283
        %v337 = vunpack.c.h.b16 %v283
        %v338 = vunpack.c.l.b16 %v284
        %v339 = vunpack.c.h.b16 %v284
        %v340 = vunpack.c.l.b16 %v285
        %v341 = vunpack.c.h.b16 %v285
        %v342 = vunpack.c.l.b16 %v286
        %v343 = vunpack.c.h.b16 %v286
        %v344 = vunpack.c.l.b16 %v287
        %v345 = vunpack.c.h.b16 %v287
        %v346 = vunpack.c.l.b16 %v288
        %v347 = vunpack.c.h.b16 %v288
        %v348 = vunpack.c.l.b16 %v289
        %v349 = vunpack.c.h.b16 %v289
        %v350 = vunpack.c.l.b16 %v290
        %v351 = vunpack.c.h.b16 %v290
        %v352 = vunpack.c.l.b16 %v291
        %v353 = vunpack.c.h.b16 %v291
        %v354 = vunpack.c.l.b16 %v292
        %v355 = vunpack.c.h.b16 %v292
        %v356 = vunpack.c.l.b16 %v293
        %v357 = vunpack.c.h.b16 %v293
        %v358 = vunpack.c.l.b16 %v294
        %v359 = vunpack.c.h.b16 %v294
        %v360 = vunpack.c.l.b16 %v295
        %v361 = vunpack.c.h.b16 %v295
        %v362 = vunpack.c.l.b16 %v296
        %v363 = vunpack.c.h.b16 %v296
        %v364 = vunpack.c.l.b16 %v297
        %v365 = vunpack.c.h.b16 %v297
        %v366 = vpack.c.b16 %v336, %v334
        %v367 = vpack.c.b16 %v337, %v335
        %v368 = vpack.c.b16 %v340, %v338
        %v369 = vpack.c.b16 %v341, %v339
        %v370 = vpack.c.b16 %v344, %v342
        %v371 = vpack.c.b16 %v345, %v343
        %v372 = vpack.c.b16 %v348, %v346
        %v373 = vpack.c.b16 %v349, %v347
        %v374 = vpack.c.b16 %v352, %v350
        %v375 = vpack.c.b16 %v353, %v351
        %v376 = vpack.c.b16 %v356, %v354
        %v377 = vpack.c.b16 %v357, %v355
        %v378 = vpack.c.b16 %v360, %v358
        %v379 = vpack.c.b16 %v361, %v359
        %v380 = vpack.c.b16 %v364, %v362
        %v381 = vpack.c.b16 %v365, %v363
        %398 = vmatprep.subr.bf16.mxu0 %v367
        %399 = vmatpush1.bf16.msra.mxu0 %v366
        %400 = vmatprep.subr.bf16.mxu0 %v369
        %401 = vmatpush1.bf16.msra.mxu0 %v368
        %402 = vmatprep.subr.bf16.mxu0 %v371
        %403 = vmatpush1.bf16.msra.mxu0 %v370
        %404 = vmatprep.subr.bf16.mxu0 %v373
        %405 = vmatpush1.bf16.msra.mxu0 %v372
        %406 = vmatprep.subr.bf16.mxu0 %v375
        %407 = vmatpush1.bf16.msra.mxu0 %v374
        %408 = vmatprep.subr.bf16.mxu0 %v377
        %409 = vmatpush1.bf16.msra.mxu0 %v376
        %410 = vmatprep.subr.bf16.mxu0 %v379
        %411 = vmatpush1.bf16.msra.mxu0 %v378
        %412 = vmatprep.subr.bf16.mxu0 %v381
        %413 = vmatpush1.bf16.msra.mxu0 %v380
        %414 = vmatprep.subr.bf16.mxu0 0
        %415 = vmatpush1.bf16.msra.mxu0 0
        %416 = vmatprep.subr.bf16.mxu0 0
        %417 = vmatpush1.bf16.msra.mxu0 0
        %418 = vmatprep.subr.bf16.mxu0 0
        %419 = vmatpush1.bf16.msra.mxu0 0
        %420 = vmatprep.subr.bf16.mxu0 0
        %421 = vmatpush1.bf16.msra.mxu0 0
        %422 = vmatprep.subr.bf16.mxu0 0
        %423 = vmatpush1.bf16.msra.mxu0 0
        %424 = vmatprep.subr.bf16.mxu0 0
        %425 = vmatpush1.bf16.msra.mxu0 0
        %426 = vmatprep.subr.bf16.mxu0 0
        %427 = vmatpush1.bf16.msra.mxu0 0
        %428 = vmatprep.subr.bf16.mxu0 0
        %429 = vmatpush1.bf16.msra.mxu0 0
        %430 = vmatprep.mubr.bf16.mxu0 0
        %431 = vmatmul.mubr.bf16.gmra.mrb[0].mxu0 %v266
        %v432 = vpop.f32.mrb[0].mxu0
        %v433 = vadd.f32 %v313, %v432
        %v434 = vpop.f32.mrb[0].mxu0
        %v435 = vadd.f32 %v317, %v434
        %v436 = vpop.f32.mrb[0].mxu0
        %v437 = vadd.f32 %v313, %v436
        %v438 = vpop.f32.mrb[0].mxu0
        %v439 = vadd.f32 %v317, %v438
        %440 = vmatprep.mubr.bf16.mxu0 0
        %441 = vmatmul.mubr.bf16.gmra.mrb[0].mxu0 %v267
        %v442 = vpop.f32.mrb[0].mxu0
        %v443 = vadd.f32 %v313, %v442
        %v444 = vpop.f32.mrb[0].mxu0
        %v445 = vadd.f32 %v317, %v444
        %v446 = vpop.f32.mrb[0].mxu0
        %v447 = vadd.f32 %v313, %v446
        %v448 = vpop.f32.mrb[0].mxu0
        %v449 = vadd.f32 %v317, %v448
        %450 = vmatprep.mubr.bf16.mxu0 0
        %451 = vmatmul.mubr.bf16.gmra.mrb[0].mxu0 %v268
        %v452 = vpop.f32.mrb[0].mxu0
        %v453 = vadd.f32 %v313, %v452
        %v454 = vpop.f32.mrb[0].mxu0
        %v455 = vadd.f32 %v317, %v454
        %v456 = vpop.f32.mrb[0].mxu0
        %v457 = vadd.f32 %v313, %v456
        %v458 = vpop.f32.mrb[0].mxu0
        %v459 = vadd.f32 %v317, %v458
        %460 = vmatprep.mubr.bf16.mxu0 0
        %461 = vmatmul.mubr.bf16.gmra.mrb[0].mxu0 %v269
        %v462 = vpop.f32.mrb[0].mxu0
        %v463 = vadd.f32 %v313, %v462
        %v464 = vpop.f32.mrb[0].mxu0
        %v465 = vadd.f32 %v317, %v464
        %v466 = vpop.f32.mrb[0].mxu0
        %v467 = vadd.f32 %v313, %v466
        %v468 = vpop.f32.mrb[0].mxu0
        %v469 = vadd.f32 %v317, %v468
        %470 = vmatprep.mubr.bf16.mxu0 0
        %471 = vmatmul.mubr.bf16.gmra.mrb[0].mxu0 %v270
        %v472 = vpop.f32.mrb[0].mxu0
        %v473 = vadd.f32 %v313, %v472
        %v474 = vpop.f32.mrb[0].mxu0
        %v475 = vadd.f32 %v317, %v474
        %v476 = vpop.f32.mrb[0].mxu0
        %v477 = vadd.f32 %v313, %v476
        %v478 = vpop.f32.mrb[0].mxu0
        %v479 = vadd.f32 %v317, %v478
        %480 = vmatprep.mubr.bf16.mxu0 0
        %481 = vmatmul.mubr.bf16.gmra.mrb[0].mxu0 %v271
        %v482 = vpop.f32.mrb[0].mxu0
        %v483 = vadd.f32 %v313, %v482
        %v484 = vpop.f32.mrb[0].mxu0
        %v485 = vadd.f32 %v317, %v484
        %v486 = vpop.f32.mrb[0].mxu0
        %v487 = vadd.f32 %v313, %v486
        %v488 = vpop.f32.mrb[0].mxu0
        %v489 = vadd.f32 %v317, %v488
        %490 = vmatprep.mubr.bf16.mxu0 0
        %491 = vmatmul.mubr.bf16.gmra.mrb[0].mxu0 %v272
        %v492 = vpop.f32.mrb[0].mxu0
        %v493 = vadd.f32 %v313, %v492
        %v494 = vpop.f32.mrb[0].mxu0
        %v495 = vadd.f32 %v317, %v494
        %v496 = vpop.f32.mrb[0].mxu0
        %v497 = vadd.f32 %v313, %v496
        %v498 = vpop.f32.mrb[0].mxu0
        %v499 = vadd.f32 %v317, %v498
        %500 = vmatprep.mubr.bf16.mxu0 0
        %501 = vmatmul.mubr.bf16.gmra.mrb[0].mxu0 %v273
        %v502 = vpop.f32.mrb[0].mxu0
        %v503 = vadd.f32 %v313, %v502
        %v504 = vpop.f32.mrb[0].mxu0
        %v505 = vadd.f32 %v317, %v504
        %v506 = vpop.f32.mrb[0].mxu0
        %v507 = vadd.f32 %v313, %v506
        %v508 = vpop.f32.mrb[0].mxu0
        %v509 = vadd.f32 %v317, %v508
        %510 = vmatprep.mubr.bf16.mxu0 0
        %511 = vmatmul.mubr.bf16.gmra.mrb[0].mxu0 %v274
        %v512 = vpop.f32.mrb[0].mxu0
        %v513 = vadd.f32 %v313, %v512
        %v514 = vpop.f32.mrb[0].mxu0
        %v515 = vadd.f32 %v317, %v514
        %v516 = vpop.f32.mrb[0].mxu0
        %v517 = vadd.f32 %v313, %v516
        %v518 = vpop.f32.mrb[0].mxu0
        %v519 = vadd.f32 %v317, %v518
        %520 = vmatprep.mubr.bf16.mxu0 0
        %521 = vmatmul.mubr.bf16.gmra.mrb[0].mxu0 %v275
        %v522 = vpop.f32.mrb[0].mxu0
        %v523 = vadd.f32 %v313, %v522
        %v524 = vpop.f32.mrb[0].mxu0
        %v525 = vadd.f32 %v317, %v524
        %v526 = vpop.f32.mrb[0].mxu0
        %v527 = vadd.f32 %v313, %v526
        %v528 = vpop.f32.mrb[0].mxu0
        %v529 = vadd.f32 %v317, %v528
        %530 = vmatprep.mubr.bf16.mxu0 0
        %531 = vmatmul.mubr.bf16.gmra.mrb[0].mxu0 %v276
        %v532 = vpop.f32.mrb[0].mxu0
        %v533 = vadd.f32 %v313, %v532
        %v534 = vpop.f32.mrb[0].mxu0
        %v535 = vadd.f32 %v317, %v534
        %v536 = vpop.f32.mrb[0].mxu0
        %v537 = vadd.f32 %v313, %v536
        %v538 = vpop.f32.mrb[0].mxu0
        %v539 = vadd.f32 %v317, %v538
        %540 = vmatprep.mubr.bf16.mxu0 0
        %541 = vmatmul.mubr.bf16.gmra.mrb[0].mxu0 %v277
        %v542 = vpop.f32.mrb[0].mxu0
        %v543 = vadd.f32 %v313, %v542
        %v544 = vpop.f32.mrb[0].mxu0
        %v545 = vadd.f32 %v317, %v544
        %v546 = vpop.f32.mrb[0].mxu0
        %v547 = vadd.f32 %v313, %v546
        %v548 = vpop.f32.mrb[0].mxu0
        %v549 = vadd.f32 %v317, %v548
        %550 = vmatprep.mubr.bf16.mxu0 0
        %551 = vmatmul.mubr.bf16.gmra.mrb[0].mxu0 %v278
        %v552 = vpop.f32.mrb[0].mxu0
        %v553 = vadd.f32 %v313, %v552
        %v554 = vpop.f32.mrb[0].mxu0
        %v555 = vadd.f32 %v317, %v554
        %v556 = vpop.f32.mrb[0].mxu0
        %v557 = vadd.f32 %v313, %v556
        %v558 = vpop.f32.mrb[0].mxu0
        %v559 = vadd.f32 %v317, %v558
        %560 = vmatprep.mubr.bf16.mxu0 0
        %561 = vmatmul.mubr.bf16.gmra.mrb[0].mxu0 %v279
        %v562 = vpop.f32.mrb[0].mxu0
        %v563 = vadd.f32 %v313, %v562
        %v564 = vpop.f32.mrb[0].mxu0
        %v565 = vadd.f32 %v317, %v564
        %v566 = vpop.f32.mrb[0].mxu0
        %v567 = vadd.f32 %v313, %v566
        %v568 = vpop.f32.mrb[0].mxu0
        %v569 = vadd.f32 %v317, %v568
        %570 = vmatprep.mubr.bf16.mxu0 0
        %571 = vmatmul.mubr.bf16.gmra.mrb[0].mxu0 %v280
        %v572 = vpop.f32.mrb[0].mxu0
        %v573 = vadd.f32 %v313, %v572
        %v574 = vpop.f32.mrb[0].mxu0
        %v575 = vadd.f32 %v317, %v574
        %v576 = vpop.f32.mrb[0].mxu0
        %v577 = vadd.f32 %v313, %v576
        %v578 = vpop.f32.mrb[0].mxu0
        %v579 = vadd.f32 %v317, %v578
        %580 = vmatprep.mubr.bf16.mxu0 0
        %581 = vmatmul.mubr.bf16.gmra.mrb[0].mxu0 %v281
        %v582 = vpop.f32.mrb[0].mxu0
        %v583 = vadd.f32 %v313, %v582
        %v584 = vpop.f32.mrb[0].mxu0
        %v585 = vadd.f32 %v317, %v584
        %v586 = vpop.f32.mrb[0].mxu0
        %v587 = vadd.f32 %v313, %v586
        %v588 = vpop.f32.mrb[0].mxu0
        %v589 = vadd.f32 %v317, %v588
        %590 = vdwg.mxu0
        %v591 = vadd.f32 %v433, %v435
        %592 = vadd.xlane.f32.xlu0 %v591
        %v593 = vpop.xlane.xlu0 %592
        %v594 = vadd.f32 %v437, %v439
        %595 = vadd.xlane.f32.xlu0 %v594
        %v596 = vpop.xlane.xlu0 %595
        %v597 = vadd.f32 %v443, %v445
        %598 = vadd.xlane.f32.xlu0 %v597
        %v599 = vpop.xlane.xlu0 %598
        %v600 = vadd.f32 %v447, %v449
        %601 = vadd.xlane.f32.xlu0 %v600
        %v602 = vpop.xlane.xlu0 %601
        %v603 = vadd.f32 %v453, %v455
        %604 = vadd.xlane.f32.xlu0 %v603
        %v605 = vpop.xlane.xlu0 %604
        %v606 = vadd.f32 %v457, %v459
        %607 = vadd.xlane.f32.xlu0 %v606
        %v608 = vpop.xlane.xlu0 %607
        %v609 = vadd.f32 %v463, %v465
        %610 = vadd.xlane.f32.xlu0 %v609
        %v611 = vpop.xlane.xlu0 %610
        %v612 = vadd.f32 %v467, %v469
        %613 = vadd.xlane.f32.xlu0 %v612
        %v614 = vpop.xlane.xlu0 %613
        %v615 = vadd.f32 %v473, %v475
        %616 = vadd.xlane.f32.xlu0 %v615
        %v617 = vpop.xlane.xlu0 %616
        %v618 = vadd.f32 %v477, %v479
        %619 = vadd.xlane.f32.xlu0 %v618
        %v620 = vpop.xlane.xlu0 %619
        %v621 = vadd.f32 %v483, %v485
        %622 = vadd.xlane.f32.xlu0 %v621
        %v623 = vpop.xlane.xlu0 %622
        %v624 = vadd.f32 %v487, %v489
        %625 = vadd.xlane.f32.xlu0 %v624
        %v626 = vpop.xlane.xlu0 %625
        %v627 = vadd.f32 %v493, %v495
        %628 = vadd.xlane.f32.xlu0 %v627
        %v629 = vpop.xlane.xlu0 %628
        %v630 = vadd.f32 %v497, %v499
        %631 = vadd.xlane.f32.xlu0 %v630
        %v632 = vpop.xlane.xlu0 %631
        %v633 = vadd.f32 %v503, %v505
        %634 = vadd.xlane.f32.xlu0 %v633
        %v635 = vpop.xlane.xlu0 %634
        %v636 = vadd.f32 %v507, %v509
        %637 = vadd.xlane.f32.xlu0 %v636
        %v638 = vpop.xlane.xlu0 %637
        %v639 = vadd.f32 %v513, %v515
        %640 = vadd.xlane.f32.xlu0 %v639
        %v641 = vpop.xlane.xlu0 %640
        %v642 = vadd.f32 %v517, %v519
        %643 = vadd.xlane.f32.xlu0 %v642
        %v644 = vpop.xlane.xlu0 %643
        %v645 = vadd.f32 %v523, %v525
        %646 = vadd.xlane.f32.xlu0 %v645
        %v647 = vpop.xlane.xlu0 %646
        %v648 = vadd.f32 %v527, %v529
        %649 = vadd.xlane.f32.xlu0 %v648
        %v650 = vpop.xlane.xlu0 %649
        %v651 = vadd.f32 %v533, %v535
        %652 = vadd.xlane.f32.xlu0 %v651
        %v653 = vpop.xlane.xlu0 %652
        %v654 = vadd.f32 %v537, %v539
        %655 = vadd.xlane.f32.xlu0 %v654
        %v656 = vpop.xlane.xlu0 %655
        %v657 = vadd.f32 %v543, %v545
        %658 = vadd.xlane.f32.xlu0 %v657
        %v659 = vpop.xlane.xlu0 %658
        %v660 = vadd.f32 %v547, %v549
        %661 = vadd.xlane.f32.xlu0 %v660
        %v662 = vpop.xlane.xlu0 %661
        %v663 = vadd.f32 %v553, %v555
        %664 = vadd.xlane.f32.xlu0 %v663
        %v665 = vpop.xlane.xlu0 %664
        %v666 = vadd.f32 %v557, %v559
        %667 = vadd.xlane.f32.xlu0 %v666
        %v668 = vpop.xlane.xlu0 %667
        %v669 = vadd.f32 %v563, %v565
        %670 = vadd.xlane.f32.xlu0 %v669
        %v671 = vpop.xlane.xlu0 %670
        %v672 = vadd.f32 %v567, %v569
        %673 = vadd.xlane.f32.xlu0 %v672
        %v674 = vpop.xlane.xlu0 %673
        %v675 = vadd.f32 %v573, %v575
        %676 = vadd.xlane.f32.xlu0 %v675
        %v677 = vpop.xlane.xlu0 %676
        %v678 = vadd.f32 %v577, %v579
        %679 = vadd.xlane.f32.xlu0 %v678
        %v680 = vpop.xlane.xlu0 %679
        %v681 = vadd.f32 %v583, %v585
        %682 = vadd.xlane.f32.xlu0 %v681
        %v683 = vpop.xlane.xlu0 %682
        %v684 = vadd.f32 %v587, %v589
        %685 = vadd.xlane.f32.xlu0 %v684
        %v686 = vpop.xlane.xlu0 %685
        %v687 = vmul.f32 %v593, 0.00390625
        %v688 = vmul.f32 %v596, 0.00390625
        %v689 = vmul.f32 %v599, 0.00390625
        %v690 = vmul.f32 %v602, 0.00390625
        %v691 = vmul.f32 %v605, 0.00390625
        %v692 = vmul.f32 %v608, 0.00390625
        %v693 = vmul.f32 %v611, 0.00390625
        %v694 = vmul.f32 %v614, 0.00390625
        %v695 = vmul.f32 %v617, 0.00390625
        %v696 = vmul.f32 %v620, 0.00390625
        %v697 = vmul.f32 %v623, 0.00390625
        %v698 = vmul.f32 %v626, 0.00390625
        %v699 = vmul.f32 %v629, 0.00390625
        %v700 = vmul.f32 %v632, 0.00390625
        %v701 = vmul.f32 %v635, 0.00390625
        %v702 = vmul.f32 %v638, 0.00390625
        %v703 = vmul.f32 %v641, 0.00390625
        %v704 = vmul.f32 %v644, 0.00390625
        %v705 = vmul.f32 %v647, 0.00390625
        %v706 = vmul.f32 %v650, 0.00390625
        %v707 = vmul.f32 %v653, 0.00390625
        %v708 = vmul.f32 %v656, 0.00390625
        %v709 = vmul.f32 %v659, 0.00390625
        %v710 = vmul.f32 %v662, 0.00390625
        %v711 = vmul.f32 %v665, 0.00390625
        %v712 = vmul.f32 %v668, 0.00390625
        %v713 = vmul.f32 %v671, 0.00390625
        %v714 = vmul.f32 %v674, 0.00390625
        %v715 = vmul.f32 %v677, 0.00390625
        %v716 = vmul.f32 %v680, 0.00390625
        %v717 = vmul.f32 %v683, 0.00390625
        %v718 = vmul.f32 %v686, 0.00390625
        %v719 = vsub.f32 %v433, %v687
        %v720 = vsub.f32 %v435, %v687
        %v721 = vsub.f32 %v437, %v688
        %v722 = vsub.f32 %v439, %v688
        %v723 = vsub.f32 %v443, %v689
        %v724 = vsub.f32 %v445, %v689
        %v725 = vsub.f32 %v447, %v690
        %v726 = vsub.f32 %v449, %v690
        %v727 = vsub.f32 %v453, %v691
        %v728 = vsub.f32 %v455, %v691
        %v729 = vsub.f32 %v457, %v692
        %v730 = vsub.f32 %v459, %v692
        %v731 = vsub.f32 %v463, %v693
        %v732 = vsub.f32 %v465, %v693
        %v733 = vsub.f32 %v467, %v694
        %v734 = vsub.f32 %v469, %v694
        %v735 = vsub.f32 %v473, %v695
        %v736 = vsub.f32 %v475, %v695
        %v737 = vsub.f32 %v477, %v696
        %v738 = vsub.f32 %v479, %v696
        %v739 = vsub.f32 %v483, %v697
        %v740 = vsub.f32 %v485, %v697
        %v741 = vsub.f32 %v487, %v698
        %v742 = vsub.f32 %v489, %v698
        %v743 = vsub.f32 %v493, %v699
        %v744 = vsub.f32 %v495, %v699
        %v745 = vsub.f32 %v497, %v700
        %v746 = vsub.f32 %v499, %v700
        %v747 = vsub.f32 %v503, %v701
        %v748 = vsub.f32 %v505, %v701
        %v749 = vsub.f32 %v507, %v702
        %v750 = vsub.f32 %v509, %v702
        %v751 = vsub.f32 %v513, %v703
        %v752 = vsub.f32 %v515, %v703
        %v753 = vsub.f32 %v517, %v704
        %v754 = vsub.f32 %v519, %v704
        %v755 = vsub.f32 %v523, %v705
        %v756 = vsub.f32 %v525, %v705
        %v757 = vsub.f32 %v527, %v706
        %v758 = vsub.f32 %v529, %v706
        %v759 = vsub.f32 %v533, %v707
        %v760 = vsub.f32 %v535, %v707
        %v761 = vsub.f32 %v537, %v708
        %v762 = vsub.f32 %v539, %v708
        %v763 = vsub.f32 %v543, %v709
        %v764 = vsub.f32 %v545, %v709
        %v765 = vsub.f32 %v547, %v710
        %v766 = vsub.f32 %v549, %v710
        %v767 = vsub.f32 %v553, %v711
        %v768 = vsub.f32 %v555, %v711
        %v769 = vsub.f32 %v557, %v712
        %v770 = vsub.f32 %v559, %v712
        %v771 = vsub.f32 %v563, %v713
        %v772 = vsub.f32 %v565, %v713
        %v773 = vsub.f32 %v567, %v714
        %v774 = vsub.f32 %v569, %v714
        %v775 = vsub.f32 %v573, %v715
        %v776 = vsub.f32 %v575, %v715
        %v777 = vsub.f32 %v577, %v716
        %v778 = vsub.f32 %v579, %v716
        %v779 = vsub.f32 %v583, %v717
        %v780 = vsub.f32 %v585, %v717
        %v781 = vsub.f32 %v587, %v718
        %v782 = vsub.f32 %v589, %v718
        %v783 = vmul.f32 %v719, %v719
        %v784 = vmul.f32 %v720, %v720
        %v785 = vmul.f32 %v721, %v721
        %v786 = vmul.f32 %v722, %v722
        %v787 = vmul.f32 %v723, %v723
        %v788 = vmul.f32 %v724, %v724
        %v789 = vmul.f32 %v725, %v725
        %v790 = vmul.f32 %v726, %v726
        %v791 = vmul.f32 %v727, %v727
        %v792 = vmul.f32 %v728, %v728
        %v793 = vmul.f32 %v729, %v729
        %v794 = vmul.f32 %v730, %v730
        %v795 = vmul.f32 %v731, %v731
        %v796 = vmul.f32 %v732, %v732
        %v797 = vmul.f32 %v733, %v733
        %v798 = vmul.f32 %v734, %v734
        %v799 = vmul.f32 %v735, %v735
        %v800 = vmul.f32 %v736, %v736
        %v801 = vmul.f32 %v737, %v737
        %v802 = vmul.f32 %v738, %v738
        %v803 = vmul.f32 %v739, %v739
        %v804 = vmul.f32 %v740, %v740
        %v805 = vmul.f32 %v741, %v741
        %v806 = vmul.f32 %v742, %v742
        %v807 = vmul.f32 %v743, %v743
        %v808 = vmul.f32 %v744, %v744
        %v809 = vmul.f32 %v745, %v745
        %v810 = vmul.f32 %v746, %v746
        %v811 = vmul.f32 %v747, %v747
        %v812 = vmul.f32 %v748, %v748
        %v813 = vmul.f32 %v749, %v749
        %v814 = vmul.f32 %v750, %v750
        %v815 = vmul.f32 %v751, %v751
        %v816 = vmul.f32 %v752, %v752
        %v817 = vmul.f32 %v753, %v753
        %v818 = vmul.f32 %v754, %v754
        %v819 = vmul.f32 %v755, %v755
        %v820 = vmul.f32 %v756, %v756
        %v821 = vmul.f32 %v757, %v757
        %v822 = vmul.f32 %v758, %v758
        %v823 = vmul.f32 %v759, %v759
        %v824 = vmul.f32 %v760, %v760
        %v825 = vmul.f32 %v761, %v761
        %v826 = vmul.f32 %v762, %v762
        %v827 = vmul.f32 %v763, %v763
        %v828 = vmul.f32 %v764, %v764
        %v829 = vmul.f32 %v765, %v765
        %v830 = vmul.f32 %v766, %v766
        %v831 = vmul.f32 %v767, %v767
        %v832 = vmul.f32 %v768, %v768
        %v833 = vmul.f32 %v769, %v769
        %v834 = vmul.f32 %v770, %v770
        %v835 = vmul.f32 %v771, %v771
        %v836 = vmul.f32 %v772, %v772
        %v837 = vmul.f32 %v773, %v773
        %v838 = vmul.f32 %v774, %v774
        %v839 = vmul.f32 %v775, %v775
        %v840 = vmul.f32 %v776, %v776
        %v841 = vmul.f32 %v777, %v777
        %v842 = vmul.f32 %v778, %v778
        %v843 = vmul.f32 %v779, %v779
        %v844 = vmul.f32 %v780, %v780
        %v845 = vmul.f32 %v781, %v781
        %v846 = vmul.f32 %v782, %v782
        %v847 = vadd.f32 %v783, %v784
        %848 = vadd.xlane.f32.xlu0 %v847
        %v849 = vpop.xlane.xlu0 %848
        %v850 = vadd.f32 %v785, %v786
        %851 = vadd.xlane.f32.xlu0 %v850
        %v852 = vpop.xlane.xlu0 %851
        %v853 = vadd.f32 %v787, %v788
        %854 = vadd.xlane.f32.xlu0 %v853
        %v855 = vpop.xlane.xlu0 %854
        %v856 = vadd.f32 %v789, %v790
        %857 = vadd.xlane.f32.xlu0 %v856
        %v858 = vpop.xlane.xlu0 %857
        %v859 = vadd.f32 %v791, %v792
        %860 = vadd.xlane.f32.xlu0 %v859
        %v861 = vpop.xlane.xlu0 %860
        %v862 = vadd.f32 %v793, %v794
        %863 = vadd.xlane.f32.xlu0 %v862
        %v864 = vpop.xlane.xlu0 %863
        %v865 = vadd.f32 %v795, %v796
        %866 = vadd.xlane.f32.xlu0 %v865
        %v867 = vpop.xlane.xlu0 %866
        %v868 = vadd.f32 %v797, %v798
        %869 = vadd.xlane.f32.xlu0 %v868
        %v870 = vpop.xlane.xlu0 %869
        %v871 = vadd.f32 %v799, %v800
        %872 = vadd.xlane.f32.xlu0 %v871
        %v873 = vpop.xlane.xlu0 %872
        %v874 = vadd.f32 %v801, %v802
        %875 = vadd.xlane.f32.xlu0 %v874
        %v876 = vpop.xlane.xlu0 %875
        %v877 = vadd.f32 %v803, %v804
        %878 = vadd.xlane.f32.xlu0 %v877
        %v879 = vpop.xlane.xlu0 %878
        %v880 = vadd.f32 %v805, %v806
        %881 = vadd.xlane.f32.xlu0 %v880
        %v882 = vpop.xlane.xlu0 %881
        %v883 = vadd.f32 %v807, %v808
        %884 = vadd.xlane.f32.xlu0 %v883
        %v885 = vpop.xlane.xlu0 %884
        %v886 = vadd.f32 %v809, %v810
        %887 = vadd.xlane.f32.xlu0 %v886
        %v888 = vpop.xlane.xlu0 %887
        %v889 = vadd.f32 %v811, %v812
        %890 = vadd.xlane.f32.xlu0 %v889
        %v891 = vpop.xlane.xlu0 %890
        %v892 = vadd.f32 %v813, %v814
        %893 = vadd.xlane.f32.xlu0 %v892
        %v894 = vpop.xlane.xlu0 %893
        %v895 = vadd.f32 %v815, %v816
        %896 = vadd.xlane.f32.xlu0 %v895
        %v897 = vpop.xlane.xlu0 %896
        %v898 = vadd.f32 %v817, %v818
        %899 = vadd.xlane.f32.xlu0 %v898
        %v900 = vpop.xlane.xlu0 %899
        %v901 = vadd.f32 %v819, %v820
        %902 = vadd.xlane.f32.xlu0 %v901
        %v903 = vpop.xlane.xlu0 %902
        %v904 = vadd.f32 %v821, %v822
        %905 = vadd.xlane.f32.xlu0 %v904
        %v906 = vpop.xlane.xlu0 %905
        %v907 = vadd.f32 %v823, %v824
        %908 = vadd.xlane.f32.xlu0 %v907
        %v909 = vpop.xlane.xlu0 %908
        %v910 = vadd.f32 %v825, %v826
        %911 = vadd.xlane.f32.xlu0 %v910
        %v912 = vpop.xlane.xlu0 %911
        %v913 = vadd.f32 %v827, %v828
        %914 = vadd.xlane.f32.xlu0 %v913
        %v915 = vpop.xlane.xlu0 %914
        %v916 = vadd.f32 %v829, %v830
        %917 = vadd.xlane.f32.xlu0 %v916
        %v918 = vpop.xlane.xlu0 %917
        %v919 = vadd.f32 %v831, %v832
        %920 = vadd.xlane.f32.xlu0 %v919
        %v921 = vpop.xlane.xlu0 %920
        %v922 = vadd.f32 %v833, %v834
        %923 = vadd.xlane.f32.xlu0 %v922
        %v924 = vpop.xlane.xlu0 %923
        %v925 = vadd.f32 %v835, %v836
        %926 = vadd.xlane.f32.xlu0 %v925
        %v927 = vpop.xlane.xlu0 %926
        %v928 = vadd.f32 %v837, %v838
        %929 = vadd.xlane.f32.xlu0 %v928
        %v930 = vpop.xlane.xlu0 %929
        %v931 = vadd.f32 %v839, %v840
        %932 = vadd.xlane.f32.xlu0 %v931
        %v933 = vpop.xlane.xlu0 %932
        %v934 = vadd.f32 %v841, %v842
        %935 = vadd.xlane.f32.xlu0 %v934
        %v936 = vpop.xlane.xlu0 %935
        %v937 = vadd.f32 %v843, %v844
        %938 = vadd.xlane.f32.xlu0 %v937
        %v939 = vpop.xlane.xlu0 %938
        %v940 = vadd.f32 %v845, %v846
        %941 = vadd.xlane.f32.xlu0 %v940
        %v942 = vpop.xlane.xlu0 %941
        %v943 = vmul.f32 %v849, 0.00390625
        %v944 = vmul.f32 %v852, 0.00390625
        %v945 = vmul.f32 %v855, 0.00390625
        %v946 = vmul.f32 %v858, 0.00390625
        %v947 = vmul.f32 %v861, 0.00390625
        %v948 = vmul.f32 %v864, 0.00390625
        %v949 = vmul.f32 %v867, 0.00390625
        %v950 = vmul.f32 %v870, 0.00390625
        %v951 = vmul.f32 %v873, 0.00390625
        %v952 = vmul.f32 %v876, 0.00390625
        %v953 = vmul.f32 %v879, 0.00390625
        %v954 = vmul.f32 %v882, 0.00390625
        %v955 = vmul.f32 %v885, 0.00390625
        %v956 = vmul.f32 %v888, 0.00390625
        %v957 = vmul.f32 %v891, 0.00390625
        %v958 = vmul.f32 %v894, 0.00390625
        %v959 = vmul.f32 %v897, 0.00390625
        %v960 = vmul.f32 %v900, 0.00390625
        %v961 = vmul.f32 %v903, 0.00390625
        %v962 = vmul.f32 %v906, 0.00390625
        %v963 = vmul.f32 %v909, 0.00390625
        %v964 = vmul.f32 %v912, 0.00390625
        %v965 = vmul.f32 %v915, 0.00390625
        %v966 = vmul.f32 %v918, 0.00390625
        %v967 = vmul.f32 %v921, 0.00390625
        %v968 = vmul.f32 %v924, 0.00390625
        %v969 = vmul.f32 %v927, 0.00390625
        %v970 = vmul.f32 %v930, 0.00390625
        %v971 = vmul.f32 %v933, 0.00390625
        %v972 = vmul.f32 %v936, 0.00390625
        %v973 = vmul.f32 %v939, 0.00390625
        %v974 = vmul.f32 %v942, 0.00390625
        %v975 = vadd.f32 %v943, 1e-05
        %v976 = vadd.f32 %v944, 1e-05
        %v977 = vadd.f32 %v945, 1e-05
        %v978 = vadd.f32 %v946, 1e-05
        %v979 = vadd.f32 %v947, 1e-05
        %v980 = vadd.f32 %v948, 1e-05
        %v981 = vadd.f32 %v949, 1e-05
        %v982 = vadd.f32 %v950, 1e-05
        %v983 = vadd.f32 %v951, 1e-05
        %v984 = vadd.f32 %v952, 1e-05
        %v985 = vadd.f32 %v953, 1e-05
        %v986 = vadd.f32 %v954, 1e-05
        %v987 = vadd.f32 %v955, 1e-05
        %v988 = vadd.f32 %v956, 1e-05
        %v989 = vadd.f32 %v957, 1e-05
        %v990 = vadd.f32 %v958, 1e-05
        %v991 = vadd.f32 %v959, 1e-05
        %v992 = vadd.f32 %v960, 1e-05
        %v993 = vadd.f32 %v961, 1e-05
        %v994 = vadd.f32 %v962, 1e-05
        %v995 = vadd.f32 %v963, 1e-05
        %v996 = vadd.f32 %v964, 1e-05
        %v997 = vadd.f32 %v965, 1e-05
        %v998 = vadd.f32 %v966, 1e-05
        %v999 = vadd.f32 %v967, 1e-05
        %v1000 = vadd.f32 %v968, 1e-05
        %v1001 = vadd.f32 %v969, 1e-05
        %v1002 = vadd.f32 %v970, 1e-05
        %v1003 = vadd.f32 %v971, 1e-05
        %v1004 = vadd.f32 %v972, 1e-05
        %v1005 = vadd.f32 %v973, 1e-05
        %v1006 = vadd.f32 %v974, 1e-05
        %v1007 = vrsqrt.pop %v975
        %v1008 = vrsqrt.pop %v976
        %v1009 = vrsqrt.pop %v977
        %v1010 = vrsqrt.pop %v978
        %v1011 = vrsqrt.pop %v979
        %v1012 = vrsqrt.pop %v980
        %v1013 = vrsqrt.pop %v981
        %v1014 = vrsqrt.pop %v982
        %v1015 = vrsqrt.pop %v983
        %v1016 = vrsqrt.pop %v984
        %v1017 = vrsqrt.pop %v985
        %v1018 = vrsqrt.pop %v986
        %v1019 = vrsqrt.pop %v987
        %v1020 = vrsqrt.pop %v988
        %v1021 = vrsqrt.pop %v989
        %v1022 = vrsqrt.pop %v990
        %v1023 = vrsqrt.pop %v991
        %v1024 = vrsqrt.pop %v992
        %v1025 = vrsqrt.pop %v993
        %v1026 = vrsqrt.pop %v994
        %v1027 = vrsqrt.pop %v995
        %v1028 = vrsqrt.pop %v996
        %v1029 = vrsqrt.pop %v997
        %v1030 = vrsqrt.pop %v998
        %v1031 = vrsqrt.pop %v999
        %v1032 = vrsqrt.pop %v1000
        %v1033 = vrsqrt.pop %v1001
        %v1034 = vrsqrt.pop %v1002
        %v1035 = vrsqrt.pop %v1003
        %v1036 = vrsqrt.pop %v1004
        %v1037 = vrsqrt.pop %v1005
        %v1038 = vrsqrt.pop %v1006
        %v1039 = vmul.f32 %v719, %v1007
        %v1040 = vmul.f32 %v720, %v1007
        %v1041 = vmul.f32 %v721, %v1008
        %v1042 = vmul.f32 %v722, %v1008
        %v1043 = vmul.f32 %v723, %v1009
        %v1044 = vmul.f32 %v724, %v1009
        %v1045 = vmul.f32 %v725, %v1010
        %v1046 = vmul.f32 %v726, %v1010
        %v1047 = vmul.f32 %v727, %v1011
        %v1048 = vmul.f32 %v728, %v1011
        %v1049 = vmul.f32 %v729, %v1012
        %v1050 = vmul.f32 %v730, %v1012
        %v1051 = vmul.f32 %v731, %v1013
        %v1052 = vmul.f32 %v732, %v1013
        %v1053 = vmul.f32 %v733, %v1014
        %v1054 = vmul.f32 %v734, %v1014
        %v1055 = vmul.f32 %v735, %v1015
        %v1056 = vmul.f32 %v736, %v1015
        %v1057 = vmul.f32 %v737, %v1016
        %v1058 = vmul.f32 %v738, %v1016
        %v1059 = vmul.f32 %v739, %v1017
        %v1060 = vmul.f32 %v740, %v1017
        %v1061 = vmul.f32 %v741, %v1018
        %v1062 = vmul.f32 %v742, %v1018
        %v1063 = vmul.f32 %v743, %v1019
        %v1064 = vmul.f32 %v744, %v1019
        %v1065 = vmul.f32 %v745, %v1020
        %v1066 = vmul.f32 %v746, %v1020
        %v1067 = vmul.f32 %v747, %v1021
        %v1068 = vmul.f32 %v748, %v1021
        %v1069 = vmul.f32 %v749, %v1022
        %v1070 = vmul.f32 %v750, %v1022
        %v1071 = vmul.f32 %v751, %v1023
        %v1072 = vmul.f32 %v752, %v1023
        %v1073 = vmul.f32 %v753, %v1024
        %v1074 = vmul.f32 %v754, %v1024
        %v1075 = vmul.f32 %v755, %v1025
        %v1076 = vmul.f32 %v756, %v1025
        %v1077 = vmul.f32 %v757, %v1026
        %v1078 = vmul.f32 %v758, %v1026
        %v1079 = vmul.f32 %v759, %v1027
        %v1080 = vmul.f32 %v760, %v1027
        %v1081 = vmul.f32 %v761, %v1028
        %v1082 = vmul.f32 %v762, %v1028
        %v1083 = vmul.f32 %v763, %v1029
        %v1084 = vmul.f32 %v764, %v1029
        %v1085 = vmul.f32 %v765, %v1030
        %v1086 = vmul.f32 %v766, %v1030
        %v1087 = vmul.f32 %v767, %v1031
        %v1088 = vmul.f32 %v768, %v1031
        %v1089 = vmul.f32 %v769, %v1032
        %v1090 = vmul.f32 %v770, %v1032
        %v1091 = vmul.f32 %v771, %v1033
        %v1092 = vmul.f32 %v772, %v1033
        %v1093 = vmul.f32 %v773, %v1034
        %v1094 = vmul.f32 %v774, %v1034
        %v1095 = vmul.f32 %v775, %v1035
        %v1096 = vmul.f32 %v776, %v1035
        %v1097 = vmul.f32 %v777, %v1036
        %v1098 = vmul.f32 %v778, %v1036
        %v1099 = vmul.f32 %v779, %v1037
        %v1100 = vmul.f32 %v780, %v1037
        %v1101 = vmul.f32 %v781, %v1038
        %v1102 = vmul.f32 %v782, %v1038
        %v1103 = vlaneseq
        %v1104 = vshrl.u32 %v1103, 7
        %v1105 = vsub.s32 1, %v1104
        %v1106 = vrot.slane %v298, %v1105
        %v1107 = vlaneseq
        %v1108 = vshrl.u32 %v1107, 7
        %v1109 = vsub.s32 5, %v1108
        %v1110 = vrot.slane %v298, %v1109
        %v1113 = vlaneseq
        %v1114 = vshrl.u32 %v1113, 7
        %v1115 = vsub.s32 1, %v1114
        %v1116 = vrot.slane %v1106, %v1115
        %v1117 = vlaneseq
        %v1118 = vshrl.u32 %v1117, 7
        %v1119 = vsub.s32 1, %v1118
        %v1120 = vrot.slane %v1110, %v1119
        %v1121 = vmul.f32 %v1039, %v1116
        %v1122 = vmul.f32 %v1040, %v1120
        %v1123 = vmul.f32 %v1041, %v1116
        %v1124 = vmul.f32 %v1042, %v1120
        %v1125 = vmul.f32 %v1043, %v1116
        %v1126 = vmul.f32 %v1044, %v1120
        %v1127 = vmul.f32 %v1045, %v1116
        %v1128 = vmul.f32 %v1046, %v1120
        %v1129 = vmul.f32 %v1047, %v1116
        %v1130 = vmul.f32 %v1048, %v1120
        %v1131 = vmul.f32 %v1049, %v1116
        %v1132 = vmul.f32 %v1050, %v1120
        %v1133 = vmul.f32 %v1051, %v1116
        %v1134 = vmul.f32 %v1052, %v1120
        %v1135 = vmul.f32 %v1053, %v1116
        %v1136 = vmul.f32 %v1054, %v1120
        %v1137 = vmul.f32 %v1055, %v1116
        %v1138 = vmul.f32 %v1056, %v1120
        %v1139 = vmul.f32 %v1057, %v1116
        %v1140 = vmul.f32 %v1058, %v1120
        %v1141 = vmul.f32 %v1059, %v1116
        %v1142 = vmul.f32 %v1060, %v1120
        %v1143 = vmul.f32 %v1061, %v1116
        %v1144 = vmul.f32 %v1062, %v1120
        %v1145 = vmul.f32 %v1063, %v1116
        %v1146 = vmul.f32 %v1064, %v1120
        %v1147 = vmul.f32 %v1065, %v1116
        %v1148 = vmul.f32 %v1066, %v1120
        %v1149 = vmul.f32 %v1067, %v1116
        %v1150 = vmul.f32 %v1068, %v1120
        %v1151 = vmul.f32 %v1069, %v1116
        %v1152 = vmul.f32 %v1070, %v1120
        %v1153 = vmul.f32 %v1071, %v1116
        %v1154 = vmul.f32 %v1072, %v1120
        %v1155 = vmul.f32 %v1073, %v1116
        %v1156 = vmul.f32 %v1074, %v1120
        %v1157 = vmul.f32 %v1075, %v1116
        %v1158 = vmul.f32 %v1076, %v1120
        %v1159 = vmul.f32 %v1077, %v1116
        %v1160 = vmul.f32 %v1078, %v1120
        %v1161 = vmul.f32 %v1079, %v1116
        %v1162 = vmul.f32 %v1080, %v1120
        %v1163 = vmul.f32 %v1081, %v1116
        %v1164 = vmul.f32 %v1082, %v1120
        %v1165 = vmul.f32 %v1083, %v1116
        %v1166 = vmul.f32 %v1084, %v1120
        %v1167 = vmul.f32 %v1085, %v1116
        %v1168 = vmul.f32 %v1086, %v1120
        %v1169 = vmul.f32 %v1087, %v1116
        %v1170 = vmul.f32 %v1088, %v1120
        %v1171 = vmul.f32 %v1089, %v1116
        %v1172 = vmul.f32 %v1090, %v1120
        %v1173 = vmul.f32 %v1091, %v1116
        %v1174 = vmul.f32 %v1092, %v1120
        %v1175 = vmul.f32 %v1093, %v1116
        %v1176 = vmul.f32 %v1094, %v1120
        %v1177 = vmul.f32 %v1095, %v1116
        %v1178 = vmul.f32 %v1096, %v1120
        %v1179 = vmul.f32 %v1097, %v1116
        %v1180 = vmul.f32 %v1098, %v1120
        %v1181 = vmul.f32 %v1099, %v1116
        %v1182 = vmul.f32 %v1100, %v1120
        %v1183 = vmul.f32 %v1101, %v1116
        %v1184 = vmul.f32 %v1102, %v1120
        %v1185 = vlaneseq
        %v1186 = vshrl.u32 %v1185, 7
        %v1187 = vsub.s32 2, %v1186
        %v1188 = vrot.slane %v298, %v1187
        %v1189 = vlaneseq
        %v1190 = vshrl.u32 %v1189, 7
        %v1191 = vsub.s32 6, %v1190
        %v1192 = vrot.slane %v298, %v1191
        %v1195 = vlaneseq
        %v1196 = vshrl.u32 %v1195, 7
        %v1197 = vsub.s32 2, %v1196
        %v1198 = vrot.slane %v1188, %v1197
        %v1199 = vlaneseq
        %v1200 = vshrl.u32 %v1199, 7
        %v1201 = vsub.s32 2, %v1200
        %v1202 = vrot.slane %v1192, %v1201
        %v1203 = vadd.f32 %v1121, %v1198
        %v1204 = vadd.f32 %v1122, %v1202
        %v1205 = vadd.f32 %v1123, %v1198
        %v1206 = vadd.f32 %v1124, %v1202
        %v1207 = vadd.f32 %v1125, %v1198
        %v1208 = vadd.f32 %v1126, %v1202
        %v1209 = vadd.f32 %v1127, %v1198
        %v1210 = vadd.f32 %v1128, %v1202
        %v1211 = vadd.f32 %v1129, %v1198
        %v1212 = vadd.f32 %v1130, %v1202
        %v1213 = vadd.f32 %v1131, %v1198
        %v1214 = vadd.f32 %v1132, %v1202
        %v1215 = vadd.f32 %v1133, %v1198
        %v1216 = vadd.f32 %v1134, %v1202
        %v1217 = vadd.f32 %v1135, %v1198
        %v1218 = vadd.f32 %v1136, %v1202
        %v1219 = vadd.f32 %v1137, %v1198
        %v1220 = vadd.f32 %v1138, %v1202
        %v1221 = vadd.f32 %v1139, %v1198
        %v1222 = vadd.f32 %v1140, %v1202
        %v1223 = vadd.f32 %v1141, %v1198
        %v1224 = vadd.f32 %v1142, %v1202
        %v1225 = vadd.f32 %v1143, %v1198
        %v1226 = vadd.f32 %v1144, %v1202
        %v1227 = vadd.f32 %v1145, %v1198
        %v1228 = vadd.f32 %v1146, %v1202
        %v1229 = vadd.f32 %v1147, %v1198
        %v1230 = vadd.f32 %v1148, %v1202
        %v1231 = vadd.f32 %v1149, %v1198
        %v1232 = vadd.f32 %v1150, %v1202
        %v1233 = vadd.f32 %v1151, %v1198
        %v1234 = vadd.f32 %v1152, %v1202
        %v1235 = vadd.f32 %v1153, %v1198
        %v1236 = vadd.f32 %v1154, %v1202
        %v1237 = vadd.f32 %v1155, %v1198
        %v1238 = vadd.f32 %v1156, %v1202
        %v1239 = vadd.f32 %v1157, %v1198
        %v1240 = vadd.f32 %v1158, %v1202
        %v1241 = vadd.f32 %v1159, %v1198
        %v1242 = vadd.f32 %v1160, %v1202
        %v1243 = vadd.f32 %v1161, %v1198
        %v1244 = vadd.f32 %v1162, %v1202
        %v1245 = vadd.f32 %v1163, %v1198
        %v1246 = vadd.f32 %v1164, %v1202
        %v1247 = vadd.f32 %v1165, %v1198
        %v1248 = vadd.f32 %v1166, %v1202
        %v1249 = vadd.f32 %v1167, %v1198
        %v1250 = vadd.f32 %v1168, %v1202
        %v1251 = vadd.f32 %v1169, %v1198
        %v1252 = vadd.f32 %v1170, %v1202
        %v1253 = vadd.f32 %v1171, %v1198
        %v1254 = vadd.f32 %v1172, %v1202
        %v1255 = vadd.f32 %v1173, %v1198
        %v1256 = vadd.f32 %v1174, %v1202
        %v1257 = vadd.f32 %v1175, %v1198
        %v1258 = vadd.f32 %v1176, %v1202
        %v1259 = vadd.f32 %v1177, %v1198
        %v1260 = vadd.f32 %v1178, %v1202
        %v1261 = vadd.f32 %v1179, %v1198
        %v1262 = vadd.f32 %v1180, %v1202
        %v1263 = vadd.f32 %v1181, %v1198
        %v1264 = vadd.f32 %v1182, %v1202
        %v1265 = vadd.f32 %v1183, %v1198
        %v1266 = vadd.f32 %v1184, %v1202
        %v1267 = vmax.f32 %v1203, 0.0
        %v1268 = vmax.f32 %v1204, 0.0
        %v1269 = vmax.f32 %v1205, 0.0
        %v1270 = vmax.f32 %v1206, 0.0
        %v1271 = vmax.f32 %v1207, 0.0
        %v1272 = vmax.f32 %v1208, 0.0
        %v1273 = vmax.f32 %v1209, 0.0
        %v1274 = vmax.f32 %v1210, 0.0
        %v1275 = vmax.f32 %v1211, 0.0
        %v1276 = vmax.f32 %v1212, 0.0
        %v1277 = vmax.f32 %v1213, 0.0
        %v1278 = vmax.f32 %v1214, 0.0
        %v1279 = vmax.f32 %v1215, 0.0
        %v1280 = vmax.f32 %v1216, 0.0
        %v1281 = vmax.f32 %v1217, 0.0
        %v1282 = vmax.f32 %v1218, 0.0
        %v1283 = vmax.f32 %v1219, 0.0
        %v1284 = vmax.f32 %v1220, 0.0
        %v1285 = vmax.f32 %v1221, 0.0
        %v1286 = vmax.f32 %v1222, 0.0
        %v1287 = vmax.f32 %v1223, 0.0
        %v1288 = vmax.f32 %v1224, 0.0
        %v1289 = vmax.f32 %v1225, 0.0
        %v1290 = vmax.f32 %v1226, 0.0
        %v1291 = vmax.f32 %v1227, 0.0
        %v1292 = vmax.f32 %v1228, 0.0
        %v1293 = vmax.f32 %v1229, 0.0
        %v1294 = vmax.f32 %v1230, 0.0
        %v1295 = vmax.f32 %v1231, 0.0
        %v1296 = vmax.f32 %v1232, 0.0
        %v1297 = vmax.f32 %v1233, 0.0
        %v1298 = vmax.f32 %v1234, 0.0
        %v1299 = vmax.f32 %v1235, 0.0
        %v1300 = vmax.f32 %v1236, 0.0
        %v1301 = vmax.f32 %v1237, 0.0
        %v1302 = vmax.f32 %v1238, 0.0
        %v1303 = vmax.f32 %v1239, 0.0
        %v1304 = vmax.f32 %v1240, 0.0
        %v1305 = vmax.f32 %v1241, 0.0
        %v1306 = vmax.f32 %v1242, 0.0
        %v1307 = vmax.f32 %v1243, 0.0
        %v1308 = vmax.f32 %v1244, 0.0
        %v1309 = vmax.f32 %v1245, 0.0
        %v1310 = vmax.f32 %v1246, 0.0
        %v1311 = vmax.f32 %v1247, 0.0
        %v1312 = vmax.f32 %v1248, 0.0
        %v1313 = vmax.f32 %v1249, 0.0
        %v1314 = vmax.f32 %v1250, 0.0
        %v1315 = vmax.f32 %v1251, 0.0
        %v1316 = vmax.f32 %v1252, 0.0
        %v1317 = vmax.f32 %v1253, 0.0
        %v1318 = vmax.f32 %v1254, 0.0
        %v1319 = vmax.f32 %v1255, 0.0
        %v1320 = vmax.f32 %v1256, 0.0
        %v1321 = vmax.f32 %v1257, 0.0
        %v1322 = vmax.f32 %v1258, 0.0
        %v1323 = vmax.f32 %v1259, 0.0
        %v1324 = vmax.f32 %v1260, 0.0
        %v1325 = vmax.f32 %v1261, 0.0
        %v1326 = vmax.f32 %v1262, 0.0
        %v1327 = vmax.f32 %v1263, 0.0
        %v1328 = vmax.f32 %v1264, 0.0
        %v1329 = vmax.f32 %v1265, 0.0
        %v1330 = vmax.f32 %v1266, 0.0
        %1331 = vst [vmem:[%s221] sm:$0xff] %v1267
        %1332 = vst [vmem:[%s221 + $0x8] sm:$0xff] %v1268
        %1333 = vst [vmem:[%s221 + $0x10] sm:$0xff] %v1269
        %1334 = vst [vmem:[%s221 + $0x18] sm:$0xff] %v1270
        %1335 = vst [vmem:[%s221 + $0x20] sm:$0xff] %v1271
        %1336 = vst [vmem:[%s221 + $0x28] sm:$0xff] %v1272
        %1337 = vst [vmem:[%s221 + $0x30] sm:$0xff] %v1273
        %1338 = vst [vmem:[%s221 + $0x38] sm:$0xff] %v1274
        %1339 = vst [vmem:[%s221 + $0x40] sm:$0xff] %v1275
        %1340 = vst [vmem:[%s221 + $0x48] sm:$0xff] %v1276
        %1341 = vst [vmem:[%s221 + $0x50] sm:$0xff] %v1277
        %1342 = vst [vmem:[%s221 + $0x58] sm:$0xff] %v1278
        %1343 = vst [vmem:[%s221 + $0x60] sm:$0xff] %v1279
        %1344 = vst [vmem:[%s221 + $0x68] sm:$0xff] %v1280
        %1345 = vst [vmem:[%s221 + $0x70] sm:$0xff] %v1281
        %1346 = vst [vmem:[%s221 + $0x78] sm:$0xff] %v1282
        %1347 = vst [vmem:[%s221 + $0x80] sm:$0xff] %v1283
        %1348 = vst [vmem:[%s221 + $0x88] sm:$0xff] %v1284
        %1349 = vst [vmem:[%s221 + $0x90] sm:$0xff] %v1285
        %1350 = vst [vmem:[%s221 + $0x98] sm:$0xff] %v1286
        %1351 = vst [vmem:[%s221 + $0xa0] sm:$0xff] %v1287
        %1352 = vst [vmem:[%s221 + $0xa8] sm:$0xff] %v1288
        %1353 = vst [vmem:[%s221 + $0xb0] sm:$0xff] %v1289
        %1354 = vst [vmem:[%s221 + $0xb8] sm:$0xff] %v1290
        %1355 = vst [vmem:[%s221 + $0xc0] sm:$0xff] %v1291
        %1356 = vst [vmem:[%s221 + $0xc8] sm:$0xff] %v1292
        %1357 = vst [vmem:[%s221 + $0xd0] sm:$0xff] %v1293
        %1358 = vst [vmem:[%s221 + $0xd8] sm:$0xff] %v1294
        %1359 = vst [vmem:[%s221 + $0xe0] sm:$0xff] %v1295
        %1360 = vst [vmem:[%s221 + $0xe8] sm:$0xff] %v1296
        %1361 = vst [vmem:[%s221 + $0xf0] sm:$0xff] %v1297
        %1362 = vst [vmem:[%s221 + $0xf8] sm:$0xff] %v1298
        %1363 = vst [vmem:[%s221 + $0x100] sm:$0xff] %v1299
        %1364 = vst [vmem:[%s221 + $0x108] sm:$0xff] %v1300
        %1365 = vst [vmem:[%s221 + $0x110] sm:$0xff] %v1301
        %1366 = vst [vmem:[%s221 + $0x118] sm:$0xff] %v1302
        %1367 = vst [vmem:[%s221 + $0x120] sm:$0xff] %v1303
        %1368 = vst [vmem:[%s221 + $0x128] sm:$0xff] %v1304
        %1369 = vst [vmem:[%s221 + $0x130] sm:$0xff] %v1305
        %1370 = vst [vmem:[%s221 + $0x138] sm:$0xff] %v1306
        %1371 = vst [vmem:[%s221 + $0x140] sm:$0xff] %v1307
        %1372 = vst [vmem:[%s221 + $0x148] sm:$0xff] %v1308
        %1373 = vst [vmem:[%s221 + $0x150] sm:$0xff] %v1309
        %1374 = vst [vmem:[%s221 + $0x158] sm:$0xff] %v1310
        %1375 = vst [vmem:[%s221 + $0x160] sm:$0xff] %v1311
        %1376 = vst [vmem:[%s221 + $0x168] sm:$0xff] %v1312
        %1377 = vst [vmem:[%s221 + $0x170] sm:$0xff] %v1313
        %1378 = vst [vmem:[%s221 + $0x178] sm:$0xff] %v1314
        %1379 = vst [vmem:[%s221 + $0x180] sm:$0xff] %v1315
        %1380 = vst [vmem:[%s221 + $0x188] sm:$0xff] %v1316
        %1381 = vst [vmem:[%s221 + $0x190] sm:$0xff] %v1317
        %1382 = vst [vmem:[%s221 + $0x198] sm:$0xff] %v1318
        %1383 = vst [vmem:[%s221 + $0x1a0] sm:$0xff] %v1319
        %1384 = vst [vmem:[%s221 + $0x1a8] sm:$0xff] %v1320
        %1385 = vst [vmem:[%s221 + $0x1b0] sm:$0xff] %v1321
        %1386 = vst [vmem:[%s221 + $0x1b8] sm:$0xff] %v1322
        %1387 = vst [vmem:[%s221 + $0x1c0] sm:$0xff] %v1323
        %1388 = vst [vmem:[%s221 + $0x1c8] sm:$0xff] %v1324
        %1389 = vst [vmem:[%s221 + $0x1d0] sm:$0xff] %v1325
        %1390 = vst [vmem:[%s221 + $0x1d8] sm:$0xff] %v1326
        %1391 = vst [vmem:[%s221 + $0x1e0] sm:$0xff] %v1327
        %1392 = vst [vmem:[%s221 + $0x1e8] sm:$0xff] %v1328
        %1393 = vst [vmem:[%s221 + $0x1f0] sm:$0xff] %v1329
        %1394 = vst [vmem:[%s221 + $0x1f8] sm:$0xff] %v1330
        %s1395 = sand.u32 %s97, 1
        %s1396 = scalar_lea.sflag [#allocation4], %s1395
        %s1397 = sand.u32 %s97, 1
        %s1398 = smul.addr %s1397, 512
        %s1399 = scalar_lea.vmem [#allocation8], %s1398
        // Predicated region
        $region45: #{tpu_custom_call.1} parent=31 // pred_check
          %p1400 = pneg %p107
        $region46: #{tpu_custom_call.1} parent=31 // pred_check_branch
          %1402 = sbr.rel (%p1400) target = $region48
        $region47: #{tpu_custom_call.1} parent=31 // pred_region
          %s1403 = smul.u32 32, %s21
          %s1404 = ssub.s32 125, %s1403
          %p1405 = scmp.lt.s32.totalorder %s1404, 32
          %s1406 = scalar_select %p1405, %s1404, 32
          %s1407 = smul.u32 128, %s1406
          %s1408 = smul.u32 %s1407, 2
          %s1410 = ssub.s32 8192, %s1408
          %1411 = vsyncadd %s1396, %s1410
          %p1412 = scmp.ne.s32.totalorder 0, %s1408
          %s1413 = smul.addr %s1403, 2
          %s1414 = smul.addr %s1413, 128
          %s1415 = scalar_lea.hbm %s3, %s1414
          %s1416 = smul.u32 16, %s1406
          %s1417 = sshll.u32 %s1399, 4
          %s1418 = int_to_ptr.vmem [resolvable:$true] %s1417
          %s1419 = sshll.u32 %s1416, 4
          %1423 = dma.vmem_to_hbm [thread:$0]  (%p1412), %s1418, %s1419, %s1415, %s1396, 256, 256, 16
        $region48: #{tpu_custom_call.1} parent=31 // pred_fallthru
          _
      $region32: #{tpu_custom_call.1} parent=5 // pred_fallthru
        _
      %p1424 = scmp.le.s32.totalorder 2, %s16
      // Predicated region
      $region49: #{tpu_custom_call.1} parent=5 // pred_check
        %p1425 = pneg %p1424
      $region50: #{tpu_custom_call.1} parent=5 // pred_check_branch
        %1427 = sbr.rel (%p1425) target = $region52
      $region51: #{tpu_custom_call.1} parent=5 // pred_region
        %s1428 = ssub.s32 %s16, 2
        // Predicated region
        $region53: #{tpu_custom_call.1} parent=51 // pred_check
          %p1429 = pneg %p113
        $region54: #{tpu_custom_call.1} parent=51 // pred_check_branch
          %1431 = sbr.rel (%p1429) target = $region56
        $region55: #{tpu_custom_call.1} parent=51 // pred_region
          %s1432 = sand.u32 %s98, 1
          %s1433 = scalar_lea.sflag [#allocation4], %s1432
          %s1434 = sand.u32 %s98, 1
          %s1435 = smul.addr %s1434, 512
          %s1436 = scalar_lea.vmem [#allocation8], %s1435
          %1437 = dma.done %s1433, 8192
        $region56: #{tpu_custom_call.1} parent=51 // pred_fallthru
          _
      $region52: #{tpu_custom_call.1} parent=5 // pred_fallthru
        _
    $region6: #{tpu_custom_call.1} parent=1 // loop_footer
      %s20 = sadd.s32 1, %s16
    $region7: #{tpu_custom_call.1} parent=1 // loop_footer_branch
      %15 = sbr.rel target = $region3
    $region8: #{tpu_custom_call.1} parent=1 // loop_exit
      _
    %1438 = vsyncpa [#allocation3], 1
    %s1439 = scalar_lea.sflag [#allocation3], 1
    %1440 = vsyncpa %s1439, 1
    %1441 = vsyncpa [#allocation6], 1
    %1442 = vsyncpa [#allocation4], 1
    %s1443 = scalar_lea.sflag [#allocation4], 1
    %1444 = vsyncpa %s1443, 1

</llo_original>
